<compile_context>
chip_gen: v7x
topology: tpu7x:2x2x1
jax: 0.10.0
libtpu: 0.0.40
codegen_flags: <defaults>
</compile_context>

<pallas_src>
import jax
import jax.numpy as jnp
from jax import lax
from jax.experimental import pallas as pl
from jax.experimental.pallas import tpu as pltpu
from functools import partial


def _round_up(x, m):
    return ((x + m - 1) // m) * m


def _kl_sample_kernel(t_ref, s_ref, w_ref, part_ref, *,
                      temperature, n_rows, tile_n, ragged):
    T = temperature
    inv_T = 1.0 / T

    # Upcast at the vreg level; inputs may be bf16 in HBM.
    t = t_ref[...].astype(jnp.float32) * inv_T
    # NOTE: the reference's +1e-8 on student logits is dropped — log_softmax is
    # shift-invariant, so adding a constant to every logit is a no-op.
    s = s_ref[...].astype(jnp.float32) * inv_T
    w = w_ref[...].astype(jnp.float32)                     # (tile_n, 1)

    if ragged:
        # Mask out-of-range rows of the (possibly partial) last tile.
        # Zero the LOGITS before exp (garbage -> NaN otherwise) and the weights.
        row0 = pl.program_id(0) * tile_n
        rows = row0 + lax.broadcasted_iota(jnp.int32, (tile_n, 1), 0)
        valid = rows < n_rows
        t = jnp.where(valid, t, 0.0)
        s = jnp.where(valid, s, 0.0)
        w = jnp.where(valid, w, 0.0)
        # (all-zero logit rows give per_sample == 0 exactly; zero weight keeps it 0)

    # Teacher: shifted exponentials + row sum (softmax pieces, never materialize p).
    t_max = jnp.max(t, axis=1, keepdims=True)
    t_shift = t - t_max
    t_exp = jnp.exp(t_shift)
    t_sum = jnp.sum(t_exp, axis=1, keepdims=True)          # (tile_n, 1)

    # Student: only the row log-sum-exp is needed.
    s_max = jnp.max(s, axis=1, keepdims=True)
    s_shift = s - s_max
    s_sum = jnp.sum(jnp.exp(s_shift), axis=1, keepdims=True)  # (tile_n, 1)

    # Simplified per-row KL:
    #   sum_c p*(log p - log q)
    #     = (sum_c t_exp*(t_shift - s_shift)) / t_sum + log(s_sum) - log(t_sum)
    cross = jnp.sum(t_exp * (t_shift - s_shift), axis=1, keepdims=True)
    inv_tsum = pl.reciprocal(t_sum, approx=False)          # exact keeps 1e-5 tolerance
    per_sample = cross * inv_tsum + jnp.log(s_sum) - jnp.log(t_sum)  # (tile_n, 1)

    partial_sum = jnp.sum(per_sample * w) * (T * T)        # scalar for this tile

    # Lane-dense, unmasked (8,128) store of this tile's partial; final sum in wrapper.
    part_ref[...] = jnp.full(part_ref.shape, partial_sum, dtype=jnp.float32)


def kl_divergence_sample(teacher_logit, student_logit, weights,
                         temperature=1.0, tile_n=None):
    """teacher_logit, student_logit: (N, C) float (f32 or bf16 — pass bf16 through,
    do NOT cast in the wrapper); weights: (N,).  Returns scalar f32."""
    N, C = teacher_logit.shape

    if tile_n is None:
        # Target ~2 MiB of f32 logits per input block (see VMEM budget in header);
        # safe on all generations with the explicit 32 MiB vmem limit below.
        bytes_per_row_f32 = C * 4
        cap = max(8, (((2 * 1024 * 1024) // bytes_per_row_f32) // 8) * 8)
        tile_n = min(cap, _round_up(N, 8))
        # Keep >= 2 grid steps so the "parallel" axis can shard across v7x's 2 TCs.
        if tile_n >= N and N >= 16:
            tile_n = _round_up((N + 1) // 2, 8)
    tile_n = max(8, (tile_n // 8) * 8)

    num_tiles = pl.cdiv(N, tile_n)
    ragged = (N % tile_n) != 0                     # static -> masking compiled only if needed

    w2d = weights.reshape(N, 1).astype(jnp.float32)

    partials = pl.pallas_call(
        partial(_kl_sample_kernel, temperature=float(temperature),
                n_rows=N, tile_n=tile_n, ragged=ragged),
        out_shape=jax.ShapeDtypeStruct((num_tiles, 8, 128), jnp.float32),
        grid=(num_tiles,),
        in_specs=[
            pl.BlockSpec((tile_n, C), lambda i: (i, 0)),
            pl.BlockSpec((tile_n, C), lambda i: (i, 0)),
            pl.BlockSpec((tile_n, 1), lambda i: (i, 0)),
        ],
        out_specs=pl.BlockSpec((1, 8, 128), lambda i: (i, 0, 0)),
        compiler_params=pltpu.CompilerParams(
            dimension_semantics=("parallel",),      # shard row tiles across TCs (v7x)
            vmem_limit_bytes=32 * 1024 * 1024,
        ),
    )(teacher_logit, student_logit, w2d)

    # Each tile's slab is filled with its partial; reduce lane/sublane 0 only.
    return jnp.sum(partials[:, 0, 0])


def _reference(teacher_logit, student_logit, weights, temperature=1.0):
    T = temperature
    p = jax.nn.softmax(teacher_logit.astype(jnp.float32) / T, axis=1)
    log_q = jax.nn.log_softmax(student_logit.astype(jnp.float32) / T + 1e-08, axis=1)
    kd = p * (jnp.log(p) - log_q) * T * T
    return jnp.dot(kd.sum(1), weights.astype(jnp.float32))


if __name__ == "__main__":
    key = jax.random.PRNGKey(0)
    k1, k2, k3 = jax.random.split(key, 3)

    # Small, lane-aligned demo: 16 samples, 128 classes.
    N, C = 16, 128
    teacher = jax.random.normal(k1, (N, C), dtype=jnp.float32)
    student = jax.random.normal(k2, (N, C), dtype=jnp.float32)
    weights = jax.random.uniform(k3, (N,), dtype=jnp.float32)

    # Explicit tile_n=8 -> 2-tile grid.
    loss = kl_divergence_sample(teacher, student, weights, temperature=2.0, tile_n=8)
    jax.block_until_ready(loss)
    ref = _reference(teacher, student, weights, temperature=2.0)
    assert jnp.allclose(loss, ref, rtol=1e-5, atol=1e-5), (loss, ref)

    # Auto-tiled path (picks tile_n=8 here so the grid still has 2 steps).
    loss_auto = kl_divergence_sample(teacher, student, weights, temperature=2.0)
    jax.block_until_ready(loss_auto)
    assert jnp.allclose(loss_auto, ref, rtol=1e-5, atol=1e-5), (loss_auto, ref)

    # Ragged N exercises the in-kernel masking path (no wrapper-side pad / HBM pass).
    N2 = 13
    loss2 = kl_divergence_sample(teacher[:N2], student[:N2], weights[:N2],
                                 temperature=1.0, tile_n=8)
    jax.block_until_ready(loss2)
    ref2 = _reference(teacher[:N2], student[:N2], weights[:N2], temperature=1.0)
    assert jnp.allclose(loss2, ref2, rtol=1e-5, atol=1e-5), (loss2, ref2)

    # bf16 at the HBM boundary (kernel upcasts per-vreg); looser tolerance.
    loss_bf16 = kl_divergence_sample(teacher.astype(jnp.bfloat16),
                                     student.astype(jnp.bfloat16),
                                     weights, temperature=2.0, tile_n=8)
    jax.block_until_ready(loss_bf16)
    ref_bf16 = _reference(teacher.astype(jnp.bfloat16), student.astype(jnp.bfloat16),
                          weights, temperature=2.0)
    assert jnp.allclose(loss_bf16, ref_bf16, rtol=2e-2, atol=2e-2), (loss_bf16, ref_bf16)

    print("KERNEL_OK")
</pallas_src>

<mosaic_0001>
module attributes {stable_mosaic.version = 11 : i64} {
  func.func @_kl_sample_kernel(%arg0: i32, %arg1: memref<8x128xf32, #tpu.memory_space<vmem>>, %arg2: memref<8x128xf32, #tpu.memory_space<vmem>>, %arg3: memref<8x1xf32, #tpu.memory_space<vmem>>, %arg4: memref<1x8x128xf32, #tpu.memory_space<vmem>>) attributes {dimension_semantics = [#tpu.dimension_semantics<parallel>], iteration_bounds = array<i64: 2>, scalar_prefetch = 0 : i64, scratch_operands = 0 : i64, tpu.core_type = #tpu.core_type<tc>, window_params = [{transform_indices = @transform_0, window_bounds = array<i64: 8, 128>}, {transform_indices = @transform_1, window_bounds = array<i64: 8, 128>}, {transform_indices = @transform_2, window_bounds = array<i64: 8, 1>}, {transform_indices = @transform_3, window_bounds = array<i64: 1, 8, 128>}]} {
    %c0 = arith.constant 0 : index
    %c0_0 = arith.constant 0 : index
    %0 = vector.load %arg1[%c0, %c0_0] : memref<8x128xf32, #tpu.memory_space<vmem>>, vector<8x128xf32>
    %cst = arith.constant 5.000000e-01 : f32
    %1 = vector.broadcast %cst : f32 to vector<8x128xf32>
    %2 = arith.mulf %0, %1 : vector<8x128xf32>
    %c0_1 = arith.constant 0 : index
    %c0_2 = arith.constant 0 : index
    %3 = vector.load %arg2[%c0_1, %c0_2] : memref<8x128xf32, #tpu.memory_space<vmem>>, vector<8x128xf32>
    %cst_3 = arith.constant 5.000000e-01 : f32
    %4 = vector.broadcast %cst_3 : f32 to vector<8x128xf32>
    %5 = arith.mulf %3, %4 : vector<8x128xf32>
    %c0_4 = arith.constant 0 : index
    %c0_5 = arith.constant 0 : index
    %6 = vector.load %arg3[%c0_4, %c0_5] : memref<8x1xf32, #tpu.memory_space<vmem>>, vector<8x1xf32>
    %cst_6 = arith.constant dense<0xFF800000> : vector<8xf32>
    %7 = vector.multi_reduction <maximumf>, %2, %cst_6 [1] : vector<8x128xf32> to vector<8xf32>
    %8 = vector.shape_cast %7 : vector<8xf32> to vector<8x1xf32>
    %9 = vector.broadcast %8 : vector<8x1xf32> to vector<8x128xf32>
    %10 = arith.subf %2, %9 : vector<8x128xf32>
    %11 = math.exp %10 : vector<8x128xf32>
    %cst_7 = arith.constant dense<0.000000e+00> : vector<8xf32>
    %12 = vector.multi_reduction <add>, %11, %cst_7 [1] : vector<8x128xf32> to vector<8xf32>
    %13 = vector.shape_cast %12 : vector<8xf32> to vector<8x1xf32>
    %cst_8 = arith.constant dense<0xFF800000> : vector<8xf32>
    %14 = vector.multi_reduction <maximumf>, %5, %cst_8 [1] : vector<8x128xf32> to vector<8xf32>
    %15 = vector.shape_cast %14 : vector<8xf32> to vector<8x1xf32>
    %16 = vector.broadcast %15 : vector<8x1xf32> to vector<8x128xf32>
    %17 = arith.subf %5, %16 : vector<8x128xf32>
    %18 = math.exp %17 : vector<8x128xf32>
    %cst_9 = arith.constant dense<0.000000e+00> : vector<8xf32>
    %19 = vector.multi_reduction <add>, %18, %cst_9 [1] : vector<8x128xf32> to vector<8xf32>
    %20 = vector.shape_cast %19 : vector<8xf32> to vector<8x1xf32>
    %21 = arith.subf %10, %17 : vector<8x128xf32>
    %22 = arith.mulf %11, %21 : vector<8x128xf32>
    %cst_10 = arith.constant dense<0.000000e+00> : vector<8xf32>
    %23 = vector.multi_reduction <add>, %22, %cst_10 [1] : vector<8x128xf32> to vector<8xf32>
    %24 = vector.shape_cast %23 : vector<8xf32> to vector<8x1xf32>
    %25 = tpu.reciprocal %13 : vector<8x1xf32> -> vector<8x1xf32>
    %26 = arith.mulf %24, %25 : vector<8x1xf32>
    %27 = math.log %20 : vector<8x1xf32>
    %28 = arith.addf %26, %27 : vector<8x1xf32>
    %29 = math.log %13 : vector<8x1xf32>
    %30 = arith.subf %28, %29 : vector<8x1xf32>
    %31 = arith.mulf %30, %6 : vector<8x1xf32>
    %32 = vector.shape_cast %31 : vector<8x1xf32> to vector<1x8x1xf32>
    %cst_11 = arith.constant dense<0.000000e+00> : vector<1xf32>
    %33 = vector.multi_reduction <add>, %32, %cst_11 [1, 2] : vector<1x8x1xf32> to vector<1xf32>
    %34 = vector.shape_cast %33 : vector<1xf32> to vector<1x1x1xf32>
    %35 = vector.extract %34[0, 0, 0] : f32 from vector<1x1x1xf32>
    %cst_12 = arith.constant 4.000000e+00 : f32
    %36 = arith.mulf %35, %cst_12 : f32
    %37 = vector.broadcast %36 : f32 to vector<1x8x128xf32>
    %c0_13 = arith.constant 0 : index
    %c0_14 = arith.constant 0 : index
    %c0_15 = arith.constant 0 : index
    %38 = vector.load %arg4[%c0_13, %c0_14, %c0_15] : memref<1x8x128xf32, #tpu.memory_space<vmem>>, vector<1x8x128xf32>
    tpu.vector_store %arg4[%c0_13, %c0_14, %c0_15], %37 {strides = array<i32>} : memref<1x8x128xf32, #tpu.memory_space<vmem>>, vector<1x8x128xf32>,
    return
  }
  func.func @transform_0(%arg0: i32) -> (i32, i32) {
    %c0_i32 = arith.constant 0 : i32
    %c0_i32_0 = arith.constant 0 : i32
    return %arg0, %c0_i32 : i32, i32
  }
  func.func @transform_1(%arg0: i32) -> (i32, i32) {
    %c0_i32 = arith.constant 0 : i32
    %c0_i32_0 = arith.constant 0 : i32
    return %arg0, %c0_i32 : i32, i32
  }
  func.func @transform_2(%arg0: i32) -> (i32, i32) {
    %c0_i32 = arith.constant 0 : i32
    %c0_i32_0 = arith.constant 0 : i32
    return %arg0, %c0_i32 : i32, i32
  }
  func.func @transform_3(%arg0: i32) -> (i32, i32, i32) {
    %c0_i32 = arith.constant 0 : i32
    %c0_i32_0 = arith.constant 0 : i32
    %c0_i32_1 = arith.constant 0 : i32
    return %arg0, %c0_i32, %c0_i32_0 : i32, i32, i32
  }
}

</mosaic_0001>

<llo_original>
// kernel: tpu_custom_call.1
$region0: #{tpu_custom_call.1}
  #allocation0 [shape = 'u32[]', space=smem, size = 0x4, offset = 0x4, fixed_abs, tag = 'smem constant byte address 0x4 - core index']
  #allocation1 [shape = 'u32[144,128]{1,0:T(1,128)}', space=vmem, size = 0x12000, scoped, tag = 'internal scratch']
  %s0 = inlined_call_operand.vmem [shape: f32[16,128], index: 0, kind: input, shape index: {}]
  %s1 = inlined_call_operand.hbm [shape: f32[16,128], index: 1, kind: input, shape index: {}]
  %s2 = inlined_call_operand.vmem [shape: f32[16,1], index: 2, kind: input, shape index: {}]
  %s3 = inlined_call_operand.hbm [shape: f32[2,8,128], index: 3, kind: output, shape index: {}]
  %s4 = sld [smem:[#allocation0]]
  $region49: #{tpu_custom_call.1} parent=0
    _
  %s6 = ssub.s32 1, %s4
  %s7 = scalar_select 0, %s6, %s4
  $region1: #{tpu_custom_call.1} parent=0
    #allocation2 [shape = 'u8[8192]{0}', space=vmem, size = 0x2000, scoped, tag = 'input window, operand 1']
    #allocation3 [shape = 's32[2]{0}', space=sflag, size = 0x8, scoped, tag = 'scoped memory for tpu_custom_call.1']
    #allocation4 [shape = 's32[2]{0}', space=sflag, size = 0x8, scoped, tag = 'scoped memory for tpu_custom_call.1']
    #allocation5 [shape = 'u8[8192]{0}', space=vmem, size = 0x2000, scoped, tag = 'output window, operand 0']
    %8 = vsyncpa [#allocation3], 0
    %s9 = scalar_lea.sflag [#allocation3], 1
    %10 = vsyncpa %s9, 0
    %11 = vsyncpa [#allocation4], 0
    %s12 = scalar_lea.sflag [#allocation4], 1
    %13 = vsyncpa %s12, 0
    loop: start=0, step=1, limit=4
    $region2: #{tpu_custom_call.1} parent=1 // loop_pre_header
      _
    $region3: #{tpu_custom_call.1} parent=1 // loop_header
      %s15 = sphi 0, %s19
      %p16 = scmp.ge.s32.totalorder %s15, 4
      %s25 = sphi 0, %s27
      %s28 = sphi 0, %s25
      %s29 = sphi 0, %s28
      %s45 = sphi 0, %s29
      %s51 = sphi 0, %s53
      %s54 = sphi 0, %s51
      %s55 = sphi 0, %s54
      %s71 = sphi 0, %s55
      %s77 = sphi 0, %s79
      %s80 = sphi 0, %s77
      %s81 = sphi 0, %s80
      %s97 = sphi 0, %s81
      %s103 = sphi 0, %s105
      %s106 = sphi 0, %s103
      %s107 = sphi 0, %s106
      %s123 = sphi 0, %s107
    $region4: #{tpu_custom_call.1} parent=1 // loop_header_branch
      %18 = sbr.rel (%p16) target = $region8
    $region5: #{tpu_custom_call.1} parent=1 // loop_body
      %s20 = ssub.s32 %s15, 1
      %s21 = ssub.s32 %s15, 2
      %s22 = sadd.s32 %s15, 1
      %s23 = ssub.s32 %s15, %s22
      %p24 = scmp.eq.s32.totalorder %s23, 0
      %s26 = sadd.s32 %s25, 1
      %s27 = scalar_select %p24, %s25, %s26
      %p30 = pneg %p24
      %p31 = scmp.eq.s32.totalorder %s15, 1
      %p32 = por %p30, %p31
      %p33 = scmp.ne.s32.totalorder %s25, %s28
      %p34 = scmp.eq.s32.totalorder %s15, 0
      %p35 = por %p33, %p34
      %p36 = scmp.ne.s32.totalorder %s25, %s28
      %p37 = scmp.eq.s32.totalorder %s20, 1
      %p38 = por %p36, %p37
      %p39 = scmp.ne.s32.totalorder %s28, %s29
      %p40 = scmp.eq.s32.totalorder %s20, 0
      %p41 = por %p39, %p40
      %p42 = scmp.ne.s32.totalorder %s28, %s29
      %p43 = scmp.eq.s32.totalorder %s21, 1
      %p44 = por %p42, %p43
      %p46 = scmp.ne.s32.totalorder %s29, %s45
      %p47 = scmp.eq.s32.totalorder %s21, 0
      %p48 = por %p46, %p47
      %s49 = ssub.s32 %s15, %s22
      %p50 = scmp.eq.s32.totalorder %s49, 0
      %s52 = sadd.s32 %s51, 1
      %s53 = scalar_select %p50, %s51, %s52
      %p56 = pneg %p50
      %p57 = scmp.eq.s32.totalorder %s15, 1
      %p58 = por %p56, %p57
      %p59 = scmp.ne.s32.totalorder %s51, %s54
      %p60 = scmp.eq.s32.totalorder %s15, 0
      %p61 = por %p59, %p60
      %p62 = scmp.ne.s32.totalorder %s51, %s54
      %p63 = scmp.eq.s32.totalorder %s20, 1
      %p64 = por %p62, %p63
      %p65 = scmp.ne.s32.totalorder %s54, %s55
      %p66 = scmp.eq.s32.totalorder %s20, 0
      %p67 = por %p65, %p66
      %p68 = scmp.ne.s32.totalorder %s54, %s55
      %p69 = scmp.eq.s32.totalorder %s21, 1
      %p70 = por %p68, %p69
      %p72 = scmp.ne.s32.totalorder %s55, %s71
      %p73 = scmp.eq.s32.totalorder %s21, 0
      %p74 = por %p72, %p73
      %s75 = ssub.s32 %s15, %s22
      %p76 = scmp.eq.s32.totalorder %s75, 0
      %s78 = sadd.s32 %s77, 1
      %s79 = scalar_select %p76, %s77, %s78
      %p82 = pneg %p76
      %p83 = scmp.eq.s32.totalorder %s15, 1
      %p84 = por %p82, %p83
      %p85 = scmp.ne.s32.totalorder %s77, %s80
      %p86 = scmp.eq.s32.totalorder %s15, 0
      %p87 = por %p85, %p86
      %p88 = scmp.ne.s32.totalorder %s77, %s80
      %p89 = scmp.eq.s32.totalorder %s20, 1
      %p90 = por %p88, %p89
      %p91 = scmp.ne.s32.totalorder %s80, %s81
      %p92 = scmp.eq.s32.totalorder %s20, 0
      %p93 = por %p91, %p92
      %p94 = scmp.ne.s32.totalorder %s80, %s81
      %p95 = scmp.eq.s32.totalorder %s21, 1
      %p96 = por %p94, %p95
      %p98 = scmp.ne.s32.totalorder %s81, %s97
      %p99 = scmp.eq.s32.totalorder %s21, 0
      %p100 = por %p98, %p99
      %s101 = ssub.s32 %s15, %s22
      %p102 = scmp.eq.s32.totalorder %s101, 0
      %s104 = sadd.s32 %s103, 1
      %s105 = scalar_select %p102, %s103, %s104
      %p108 = pneg %p102
      %p109 = scmp.eq.s32.totalorder %s15, 1
      %p110 = por %p108, %p109
      %p111 = scmp.ne.s32.totalorder %s103, %s106
      %p112 = scmp.eq.s32.totalorder %s15, 0
      %p113 = por %p111, %p112
      %p114 = scmp.ne.s32.totalorder %s103, %s106
      %p115 = scmp.eq.s32.totalorder %s20, 1
      %p116 = por %p114, %p115
      %p117 = scmp.ne.s32.totalorder %s106, %s107
      %p118 = scmp.eq.s32.totalorder %s20, 0
      %p119 = por %p117, %p118
      %p120 = scmp.ne.s32.totalorder %s106, %s107
      %p121 = scmp.eq.s32.totalorder %s21, 1
      %p122 = por %p120, %p121
      %p124 = scmp.ne.s32.totalorder %s107, %s123
      %p125 = scmp.eq.s32.totalorder %s21, 0
      %p126 = por %p124, %p125
      %p127 = scmp.le.s32.totalorder 1, %s15
      %p128 = scmp.lt.s32.totalorder %s15, 3
      %p129 = pnand %p127, %p128
      %p130 = pneg %p129
      // Predicated region
      $region9: #{tpu_custom_call.1} parent=5 // pred_check
        _
      $region10: #{tpu_custom_call.1} parent=5 // pred_check_branch
        %132 = sbr.rel (%p129) target = $region12
      $region11: #{tpu_custom_call.1} parent=5 // pred_region
        %s133 = ssub.s32 %s15, 1
      $region12: #{tpu_custom_call.1} parent=5 // pred_fallthru
        _
      %p134 = scmp.lt.s32.totalorder %s15, 2
      // Predicated region
      $region13: #{tpu_custom_call.1} parent=5 // pred_check
        %p135 = pneg %p134
      $region14: #{tpu_custom_call.1} parent=5 // pred_check_branch
        %137 = sbr.rel (%p135) target = $region16
      $region15: #{tpu_custom_call.1} parent=5 // pred_region
        // Predicated region
        $region17: #{tpu_custom_call.1} parent=15 // pred_check
          %p138 = pneg %p35
        $region18: #{tpu_custom_call.1} parent=15 // pred_check_branch
          %140 = sbr.rel (%p138) target = $region20
        $region19: #{tpu_custom_call.1} parent=15 // pred_region
          %p141 = scmp.lt.s32.totalorder %s15, 1
          %s142 = scalar_select %p141, %s15, 1
          %s143 = smul.addr %s142, 8
          %s144 = scalar_lea.vmem %s0, %s143
        $region20: #{tpu_custom_call.1} parent=15 // pred_fallthru
          _
        // Predicated region
        $region21: #{tpu_custom_call.1} parent=15 // pred_check
          %p145 = pneg %p61
        $region22: #{tpu_custom_call.1} parent=15 // pred_check_branch
          %147 = sbr.rel (%p145) target = $region24
        $region23: #{tpu_custom_call.1} parent=15 // pred_region
          %s148 = sand.u32 %s51, 1
          %s149 = scalar_lea.sflag [#allocation3], %s148
          %s150 = sand.u32 %s51, 1
          %s151 = smul.addr %s150, 8
          %s152 = scalar_lea.vmem [#allocation2], %s151
          %s154 = ssub.s32 128, 128
          %155 = vsyncadd %s149, %s154
          %s156 = smul.addr %s15, 128
          %s157 = scalar_lea.hbm %s1, %s156
          %s159 = sshll.u32 %s152, 4
          %s160 = int_to_ptr.vmem [resolvable:$true] %s159
          %162 = dma.hbm_to_vmem [thread:$0]  %s157, 128, %s160, %s149
        $region24: #{tpu_custom_call.1} parent=15 // pred_fallthru
          _
        // Predicated region
        $region25: #{tpu_custom_call.1} parent=15 // pred_check
          %p163 = pneg %p87
        $region26: #{tpu_custom_call.1} parent=15 // pred_check_branch
          %165 = sbr.rel (%p163) target = $region28
        $region27: #{tpu_custom_call.1} parent=15 // pred_region
          %p166 = scmp.lt.s32.totalorder %s15, 1
          %s167 = scalar_select %p166, %s15, 1
          %s168 = smul.addr %s167, 8
          %s169 = scalar_lea.vmem %s2, %s168
        $region28: #{tpu_custom_call.1} parent=15 // pred_fallthru
          _
      $region16: #{tpu_custom_call.1} parent=5 // pred_fallthru
        _
      %p170 = scmp.le.s32.totalorder 1, %s15
      %p171 = scmp.lt.s32.totalorder %s15, 3
      %p172 = pnand %p170, %p171
      %p173 = pneg %p172
      // Predicated region
      $region29: #{tpu_custom_call.1} parent=5 // pred_check
        _
      $region30: #{tpu_custom_call.1} parent=5 // pred_check_branch
        %175 = sbr.rel (%p172) target = $region32
      $region31: #{tpu_custom_call.1} parent=5 // pred_region
        %s176 = ssub.s32 %s15, 1
        %s177 = sand.u32 %s54, 1
        %s178 = scalar_lea.sflag [#allocation3], %s177
        %s179 = sand.u32 %s54, 1
        %s180 = smul.addr %s179, 8
        %s181 = scalar_lea.vmem [#allocation2], %s180
        // Predicated region
        $region33: #{tpu_custom_call.1} parent=31 // pred_check
          %p182 = pneg %p67
        $region34: #{tpu_custom_call.1} parent=31 // pred_check_branch
          %184 = sbr.rel (%p182) target = $region36
        $region35: #{tpu_custom_call.1} parent=31 // pred_region
          %185 = dma.done %s178, 128
        $region36: #{tpu_custom_call.1} parent=31 // pred_fallthru
          _
        %p186 = scmp.lt.s32.totalorder %s20, 1
        %s187 = scalar_select %p186, %s20, 1
        %s188 = smul.addr %s187, 8
        %s189 = scalar_lea.vmem %s0, %s188
        %p190 = pneg %p41
        %p191 = pneg %p38
        %s192 = sand.u32 %s54, 1
        %s193 = scalar_lea.sflag [#allocation3], %s192
        %s194 = sand.u32 %s54, 1
        %s195 = smul.addr %s194, 8
        %s196 = scalar_lea.vmem [#allocation2], %s195
        %p197 = pneg %p67
        %p198 = pneg %p64
        %p199 = scmp.lt.s32.totalorder %s20, 1
        %s200 = scalar_select %p199, %s20, 1
        %s201 = smul.addr %s200, 8
        %s202 = scalar_lea.vmem %s2, %s201
        %p203 = pneg %p93
        %p204 = pneg %p90
        %p205 = pneg %p119
        %p206 = pneg %p116
        %s207 = sand.u32 %s106, 1
        %s208 = scalar_lea.sflag [#allocation4], %s207
        %s209 = sand.u32 %s106, 1
        %s210 = smul.addr %s209, 8
        %s211 = scalar_lea.vmem [#allocation5], %s210
        %p212 = scmp.lt.s32.totalorder %s20, 1
        %s213 = scalar_select %p212, %s20, 1
        %s214 = smul.addr %s213, 8
        %s215 = scalar_lea.vmem %s0, %s214
        %p216 = scmp.lt.s32.totalorder %s20, 1
        %s217 = scalar_select %p216, %s20, 1
        %s218 = smul.addr %s217, 8
        %s219 = scalar_lea.vmem %s2, %s218
        %v220 = vld [vmem:[%s215] sm:$0xff]
        %v221 = vmul.f32 %v220, 0.5
        %v222 = vld [vmem:[%s181] sm:$0xff]
        %v223 = vmul.f32 %v222, 0.5
        %v224 = vld [vmem:[%s219] sm:$0xff]
        %225 = vmax.xlane.f32.xlu0 %v221
        %v226 = vpop.xlane.xlu0 %225
        %v227 = vsub.f32 %v221, %v226
        %v228 = vmul.f32 %v227, 1.442695
        %v229 = vpow.pop %v228
        %230 = vadd.xlane.f32.xlu0 %v229
        %v231 = vpop.xlane.xlu0 %230
        %232 = vmax.xlane.f32.xlu0 %v223
        %v233 = vpop.xlane.xlu0 %232
        %v234 = vsub.f32 %v223, %v233
        %v235 = vmul.f32 %v234, 1.442695
        %v236 = vpow.pop %v235
        %237 = vadd.xlane.f32.xlu0 %v236
        %v238 = vpop.xlane.xlu0 %237
        %v239 = vsub.f32 %v227, %v234
        %v240 = vmul.f32 %v229, %v239
        %241 = vadd.xlane.f32.xlu0 %v240
        %v242 = vpop.xlane.xlu0 %241
        %v243 = vrcp.pop %v231
        %v244 = vmul.f32 %v242, %v243
        %v245 = vlog2.pop %v238
        %v246 = vmul.f32 %v245, 0.6931472
        %v247 = vadd.f32 %v244, %v246
        %v248 = vlog2.pop %v231
        %v249 = vmul.f32 %v248, 0.6931472
        %v250 = vsub.f32 %v247, %v249
        %v251 = vmul.f32 %v250, %v224
        %vm252 = vcmask 7168
        %v253 = vsel %vm252, %v251, 0.0
        %254 = vadd.xlane.f32.xlu0 %v253
        %v255 = vpop.xlane.xlu0 %254
        %v256 = vrot.slane %v255, 4
        %v257 = vadd.f32 %v255, %v256
        %v258 = vrot.slane %v257, 2
        %v259 = vadd.f32 %v257, %v258
        %v260 = vrot.slane %v259, 1
        %v261 = vadd.f32 %v259, %v260
        %s262 = vtos %v261
        %s263 = smul.f32 %s262, 4.0
        %v264 = vstv %s263
        %265 = vst [vmem:[%s211] sm:$0xff] %v264
        %s266 = sand.u32 %s106, 1
        %s267 = scalar_lea.sflag [#allocation4], %s266
        %s268 = sand.u32 %s106, 1
        %s269 = smul.addr %s268, 8
        %s270 = scalar_lea.vmem [#allocation5], %s269
        // Predicated region
        $region37: #{tpu_custom_call.1} parent=31 // pred_check
          %p271 = pneg %p116
        $region38: #{tpu_custom_call.1} parent=31 // pred_check_branch
          %273 = sbr.rel (%p271) target = $region40
        $region39: #{tpu_custom_call.1} parent=31 // pred_region
          %s275 = ssub.s32 128, 128
          %276 = vsyncadd %s267, %s275
          %s277 = smul.addr %s20, 128
          %s278 = scalar_lea.hbm %s3, %s277
          %s280 = sshll.u32 %s270, 4
          %s281 = int_to_ptr.vmem [resolvable:$true] %s280
          %283 = dma.vmem_to_hbm [thread:$0]  %s281, 128, %s278, %s267
        $region40: #{tpu_custom_call.1} parent=31 // pred_fallthru
          _
      $region32: #{tpu_custom_call.1} parent=5 // pred_fallthru
        _
      %p284 = scmp.le.s32.totalorder 2, %s15
      // Predicated region
      $region41: #{tpu_custom_call.1} parent=5 // pred_check
        %p285 = pneg %p284
      $region42: #{tpu_custom_call.1} parent=5 // pred_check_branch
        %287 = sbr.rel (%p285) target = $region44
      $region43: #{tpu_custom_call.1} parent=5 // pred_region
        %s288 = ssub.s32 %s15, 2
        // Predicated region
        $region45: #{tpu_custom_call.1} parent=43 // pred_check
          %p289 = pneg %p122
        $region46: #{tpu_custom_call.1} parent=43 // pred_check_branch
          %291 = sbr.rel (%p289) target = $region48
        $region47: #{tpu_custom_call.1} parent=43 // pred_region
          %s292 = sand.u32 %s107, 1
          %s293 = scalar_lea.sflag [#allocation4], %s292
          %s294 = sand.u32 %s107, 1
          %s295 = smul.addr %s294, 8
          %s296 = scalar_lea.vmem [#allocation5], %s295
          %297 = dma.done %s293, 128
        $region48: #{tpu_custom_call.1} parent=43 // pred_fallthru
          _
      $region44: #{tpu_custom_call.1} parent=5 // pred_fallthru
        _
    $region6: #{tpu_custom_call.1} parent=1 // loop_footer
      %s19 = sadd.s32 1, %s15
    $region7: #{tpu_custom_call.1} parent=1 // loop_footer_branch
      %14 = sbr.rel target = $region3
    $region8: #{tpu_custom_call.1} parent=1 // loop_exit
      _
    %298 = vsyncpa [#allocation3], 1
    %s299 = scalar_lea.sflag [#allocation3], 1
    %300 = vsyncpa %s299, 1
    %301 = vsyncpa [#allocation4], 1
    %s302 = scalar_lea.sflag [#allocation4], 1
    %303 = vsyncpa %s302, 1

</llo_original>
